<compile_context>
chip_gen: v6e
topology: v6e:2x2x1
jax: 0.10.0
libtpu: 0.0.40
codegen_flags: <defaults>
</compile_context>

<pallas_src>
import jax
import jax.numpy as jnp
from jax.experimental import pallas as pl
from jax.experimental.pallas import tpu as pltpu


def _gate_scale(hidden_size):
    """Per-lane scale for the fused [d | i | o | c] gate slab.

    d lanes -> 0   (dead value in the reference forward, never consumed)
    i,o lanes -> 0.5  (sigmoid(z) = 0.5*tanh(z/2) + 0.5)
    c lanes -> 1.0 (plain tanh)
    """
    lane = jax.lax.broadcasted_iota(jnp.int32, (1, 4 * hidden_size), 1)
    return jnp.where(lane < hidden_size, 0.0,
                     jnp.where(lane < 3 * hidden_size, 0.5, 1.0)
                     ).astype(jnp.float32)


def _make_kernel(batch, hidden_size, with_h0):
    """Build the per-sequence MLSTM recurrence kernel (B fully unrolled)."""
    H = hidden_size

    def kernel(*refs):
        if with_h0:
            x_ref, h0_ref, wu_ref, ww_ref, b_ref, out_ref = refs
        else:
            x_ref, wu_ref, ww_ref, b_ref, out_ref = refs
            h0_ref = None

        # Hoisted once per grid step: gate-scale fold + bf16 casts (MXU-native).
        scale = _gate_scale(H)                                     # (1, 4H)
        wu_s = (wu_ref[...] * scale).astype(jnp.bfloat16)          # (H, 4H)
        ww_bf = ww_ref[...].astype(jnp.bfloat16)                   # (I, 4H)

        # Input path has no loop-carried dependency: one (B,I)@(I,4H) matmul,
        # bias add and gate scaling, all off the recurrence critical chain.
        wx = (jnp.dot(x_ref[...].astype(jnp.bfloat16), ww_bf,
                      preferred_element_type=jnp.float32)
              + b_ref[...]) * scale                                # (B, 4H)
        # Pre-split rows so the per-step sublane extracts are not on the chain.
        wx_rows = [wx[t:t + 1, :] for t in range(batch)]

        # h carried across the loop edge in bf16 (MXU operand width).
        h_bf = None if h0_ref is None else h0_ref[...].astype(jnp.bfloat16)

        # B is small & static -> fully unrolled recurrence.
        for t in range(batch):
            if t == 0 and h_bf is None:
                # h == 0 at step 0: gates reduce to the input path exactly.
                gates = wx_rows[0]                                 # (1, 4H)
            else:
                # One lane-full (1,H)@(H,4H) MXU op per step.
                gates = (jnp.dot(h_bf, wu_s,
                                 preferred_element_type=jnp.float32)
                         + wx_rows[t])                             # (1, 4H)

            # Single full-vreg EUP pass covering i, o (via tanh/2) and c;
            # the dead d lanes are tanh(0) and never read.
            act = jnp.tanh(gates)                                  # (1, 4H)
            i_gate = act[:, H:2 * H] * 0.5 + 0.5                   # sigmoid(i)
            o_gate = act[:, 2 * H:3 * H] * 0.5 + 0.5               # sigmoid(o)
            c_tilde = act[:, 3 * H:]                               # tanh(c)

            mem = i_gate * c_tilde              # memory_cell (no carry in ref)
            h_f32 = o_gate * jnp.tanh(mem)      # new hidden_state, f32

            # Per-step row store (vst slot idle; off the recurrence chain).
            out_ref[t:t + 1, :] = h_f32
            h_bf = h_f32.astype(jnp.bfloat16)

    return kernel


def mlstms_forward(x, nodes_i, params, initial_hidden=None):
    """Pallas equivalent of MLSTMs.forward(x, nodes_i).

    x: (B, I) for a single forward() call, or (N, B, I) to run N independent
       forward() calls (e.g. separate graph snapshots) in ONE pallas_call.
    initial_hidden: optional (H,) / (N, H) hidden state carried over from a
       previous call (the reference cell is stateful); defaults to zeros.
    """
    # nodes_i is accepted for API parity but is functionally irrelevant: the
    # reference builds `[MLSTM(...)] * num_nodes`, i.e. one shared cell.
    del nodes_i
    wu, ww, b = params
    H = wu.shape[0]
    I = ww.shape[0]

    squeeze = (x.ndim == 2)
    if squeeze:
        x = x[None]
    N, B, _ = x.shape
    assert (B * H) % I == 0, "final reshape(-1, input_size) needs B*H % I == 0"

    with_h0 = initial_hidden is not None
    kernel = _make_kernel(B, H, with_h0)

    # x / out blocks indexed by the sequence axis; weight blocks use constant
    # index maps so they stay resident in VMEM across grid steps (no re-DMA).
    in_specs = [pl.BlockSpec((None, B, I), lambda n: (n, 0, 0))]
    args = [x.astype(jnp.float32)]
    if with_h0:
        h0 = jnp.asarray(initial_hidden, jnp.float32).reshape(-1, H)
        h0 = jnp.broadcast_to(h0, (N, H)).reshape(N, 1, H)
        in_specs.append(pl.BlockSpec((None, 1, H), lambda n: (n, 0, 0)))
        args.append(h0)
    in_specs += [
        pl.BlockSpec((H, 4 * H), lambda n: (0, 0)),   # wu (resident)
        pl.BlockSpec((I, 4 * H), lambda n: (0, 0)),   # ww (resident)
        pl.BlockSpec((1, 4 * H), lambda n: (0, 0)),   # bias (resident)
    ]
    args += [wu, ww, b]

    hidden = pl.pallas_call(
        kernel,
        grid=(N,),
        in_specs=in_specs,
        out_specs=pl.BlockSpec((None, B, H), lambda n: (n, 0, 0)),
        out_shape=jax.ShapeDtypeStruct((N, B, H), jnp.float32),
        compiler_params=pltpu.CompilerParams(
            dimension_semantics=("parallel",)),   # shard N across v7x's 2 TCs
    )(*args)

    # torch.reshape(res, (-1, x.size(1))) per sequence.
    out = hidden.reshape(N, (B * H) // I, I)
    return out[0] if squeeze else out


def init_params(key, input_size, hidden_size):
    """Deterministic fused params mimicking nn.Linear default init.

    Gate order along the fused (4H) axis: [d | i | o | c].
    Stored pre-transposed so the kernel computes h @ W (row-vector @ matrix).
    """
    k_u, k_w, k_bu, k_bw = jax.random.split(key, 4)
    bound_u = 1.0 / (hidden_size ** 0.5)
    bound_w = 1.0 / (input_size ** 0.5)
    wu = jax.random.uniform(k_u, (hidden_size, 4 * hidden_size), jnp.float32,
                            -bound_u, bound_u)
    ww = jax.random.uniform(k_w, (input_size, 4 * hidden_size), jnp.float32,
                            -bound_w, bound_w)
    b = (jax.random.uniform(k_bu, (1, 4 * hidden_size), jnp.float32,
                            -bound_u, bound_u)
         + jax.random.uniform(k_bw, (1, 4 * hidden_size), jnp.float32,
                              -bound_w, bound_w))
    return wu, ww, b


def mlstm_reference(x_seq, params, h0=None):
    """Pure-JAX f32 reference of the shared-cell recurrence (for checking)."""
    wu, ww, b = params
    H = wu.shape[0]
    hp = jax.lax.Precision.HIGHEST
    h = jnp.zeros((H,), jnp.float32) if h0 is None else jnp.asarray(h0, jnp.float32)
    outs = []
    for t in range(x_seq.shape[0]):
        g = (jnp.dot(h, wu, precision=hp)
             + jnp.dot(x_seq[t], ww, precision=hp) + b[0])
        i = jax.nn.sigmoid(g[H:2 * H])
        o = jax.nn.sigmoid(g[2 * H:3 * H])
        c = jnp.tanh(g[3 * H:])
        h = o * jnp.tanh(i * c)
        outs.append(h)
    return jnp.stack(outs)   # (B, H)


if __name__ == "__main__":
    input_size = 32
    hidden_size = 32   # equal so the final (-1, input_size) reshape is exact
    num_nodes = 5
    batch = 8
    num_seqs = 4       # independent sequences batched into one pallas_call

    key = jax.random.PRNGKey(0)
    k_param, k_x = jax.random.split(key)
    params = init_params(k_param, input_size, hidden_size)

    xs = jax.random.normal(k_x, (num_seqs, batch, input_size), dtype=jnp.float32)
    nodes_i = jnp.arange(batch, dtype=jnp.int32) % num_nodes  # unused (shared cell)

    # Batched path: num_seqs independent MLSTMs.forward() calls in one kernel.
    out_batched = mlstms_forward(xs, nodes_i, params)
    jax.block_until_ready(out_batched)
    assert out_batched.shape == (num_seqs, batch * hidden_size // input_size,
                                 input_size)

    # Single-call path (reference API shape).
    out_single = mlstms_forward(xs[0], nodes_i, params)
    jax.block_until_ready(out_single)
    assert out_single.shape == (batch * hidden_size // input_size, input_size)

    # Numerics vs. pure-JAX f32 reference (kernel uses bf16 MXU operands).
    ref_finals = []
    for n in range(num_seqs):
        ref_h = mlstm_reference(xs[n], params)                 # (B, H)
        ref = ref_h.reshape(-1, input_size)
        assert jnp.allclose(out_batched[n], ref, atol=3e-2, rtol=3e-2), (
            "max err", float(jnp.max(jnp.abs(out_batched[n] - ref))))
        ref_finals.append(ref_h[-1])
    assert jnp.allclose(out_single, out_batched[0], atol=1e-6)

    # Stateful continuation: the reference cell carries hidden_state across
    # forward() calls; feed the final h back in as initial_hidden.
    h_carry = out_batched[:, -1, :]                            # (N, H)
    out_cont = mlstms_forward(xs, nodes_i, params, initial_hidden=h_carry)
    jax.block_until_ready(out_cont)
    for n in range(num_seqs):
        ref2 = mlstm_reference(xs[n], params,
                               h0=ref_finals[n]).reshape(-1, input_size)
        assert jnp.allclose(out_cont[n], ref2, atol=3e-2, rtol=3e-2), (
            "max err (cont)", float(jnp.max(jnp.abs(out_cont[n] - ref2))))

    # TODO(synk): MLSTMCell.compute_weights / compute_memory_cell (gamma-based
    # fractional memory over the lag deque) are never called by forward(), and
    # the lag deque is written but never read — no output-affecting equivalent
    # to translate.
    print("KERNEL_OK")
</pallas_src>

<mosaic_0001>
module attributes {stable_mosaic.version = 11 : i64} {
  func.func @kernel(%arg0: i32, %arg1: memref<1x8x32xf32, #tpu.memory_space<vmem>>, %arg2: memref<32x128xf32, #tpu.memory_space<vmem>>, %arg3: memref<32x128xf32, #tpu.memory_space<vmem>>, %arg4: memref<1x128xf32, #tpu.memory_space<vmem>>, %arg5: memref<1x8x32xf32, #tpu.memory_space<vmem>>) attributes {dimension_semantics = [#tpu.dimension_semantics<parallel>], iteration_bounds = array<i64: 4>, scalar_prefetch = 0 : i64, scratch_operands = 0 : i64, tpu.core_type = #tpu.core_type<tc>, window_params = [{transform_indices = @transform_0, window_bounds = array<i64: 1, 8, 32>}, {pipeline_mode = #tpu.pipeline_mode<synchronous>, transform_indices = @transform_1, window_bounds = array<i64: 32, 128>}, {pipeline_mode = #tpu.pipeline_mode<synchronous>, transform_indices = @transform_2, window_bounds = array<i64: 32, 128>}, {pipeline_mode = #tpu.pipeline_mode<synchronous>, transform_indices = @transform_3, window_bounds = array<i64: 1, 128>}, {transform_indices = @transform_4, window_bounds = array<i64: 1, 8, 32>}]} {
    %0 = tpu.iota {dimensions = array<i32: 1>} : vector<1x128xi32>
    %c32_i32 = arith.constant 32 : i32
    %1 = vector.broadcast %c32_i32 : i32 to vector<1x128xi32>
    %2 = arith.cmpi slt, %0, %1 : vector<1x128xi32>
    %c96_i32 = arith.constant 96 : i32
    %3 = vector.broadcast %c96_i32 : i32 to vector<1x128xi32>
    %4 = arith.cmpi slt, %0, %3 : vector<1x128xi32>
    %cst = arith.constant 5.000000e-01 : f32
    %cst_0 = arith.constant 1.000000e+00 : f32
    %5 = vector.broadcast %cst : f32 to vector<1x128xf32>
    %6 = vector.broadcast %cst_0 : f32 to vector<1x128xf32>
    %7 = arith.select %4, %5, %6 : vector<1x128xi1>, vector<1x128xf32>
    %cst_1 = arith.constant 0.000000e+00 : f32
    %8 = vector.broadcast %cst_1 : f32 to vector<1x128xf32>
    %9 = arith.select %2, %8, %7 : vector<1x128xi1>, vector<1x128xf32>
    %c0 = arith.constant 0 : index
    %c0_2 = arith.constant 0 : index
    %10 = vector.load %arg2[%c0, %c0_2] : memref<32x128xf32, #tpu.memory_space<vmem>>, vector<32x128xf32>
    %11 = vector.broadcast %9 : vector<1x128xf32> to vector<32x128xf32>
    %12 = arith.mulf %10, %11 : vector<32x128xf32>
    %13 = arith.truncf %12 : vector<32x128xf32> to vector<32x128xbf16>
    %c0_3 = arith.constant 0 : index
    %c0_4 = arith.constant 0 : index
    %14 = vector.load %arg3[%c0_3, %c0_4] : memref<32x128xf32, #tpu.memory_space<vmem>>, vector<32x128xf32>
    %15 = arith.truncf %14 : vector<32x128xf32> to vector<32x128xbf16>
    %c0_5 = arith.constant 0 : index
    %c0_6 = arith.constant 0 : index
    %c0_7 = arith.constant 0 : index
    %16 = vector.load %arg1[%c0_5, %c0_6, %c0_7] : memref<1x8x32xf32, #tpu.memory_space<vmem>>, vector<1x8x32xf32>
    %17 = vector.shape_cast %16 : vector<1x8x32xf32> to vector<8x32xf32>
    %18 = arith.truncf %17 : vector<8x32xf32> to vector<8x32xbf16>
    %cst_8 = arith.constant dense<0.000000e+00> : vector<8x128xf32>
    %19 = tpu.matmul %18, %15, %cst_8 {dimension_numbers = #tpu.dot_dimension_numbers<[1], [0], [0], [1], [0, 0, 1, 1], [], []>} : vector<8x32xbf16>, vector<32x128xbf16>, vector<8x128xf32> -> vector<8x128xf32>
    %c0_9 = arith.constant 0 : index
    %c0_10 = arith.constant 0 : index
    %20 = vector.load %arg4[%c0_9, %c0_10] : memref<1x128xf32, #tpu.memory_space<vmem>>, vector<1x128xf32>
    %21 = vector.broadcast %20 : vector<1x128xf32> to vector<8x128xf32>
    %22 = arith.addf %19, %21 : vector<8x128xf32>
    %23 = vector.broadcast %9 : vector<1x128xf32> to vector<8x128xf32>
    %24 = arith.mulf %22, %23 : vector<8x128xf32>
    %25 = vector.extract_strided_slice %24 {offsets = [0, 0], sizes = [1, 128], strides = [1, 1]} : vector<8x128xf32> to vector<1x128xf32>
    %26 = vector.extract_strided_slice %24 {offsets = [1, 0], sizes = [1, 128], strides = [1, 1]} : vector<8x128xf32> to vector<1x128xf32>
    %27 = vector.extract_strided_slice %24 {offsets = [2, 0], sizes = [1, 128], strides = [1, 1]} : vector<8x128xf32> to vector<1x128xf32>
    %28 = vector.extract_strided_slice %24 {offsets = [3, 0], sizes = [1, 128], strides = [1, 1]} : vector<8x128xf32> to vector<1x128xf32>
    %29 = vector.extract_strided_slice %24 {offsets = [4, 0], sizes = [1, 128], strides = [1, 1]} : vector<8x128xf32> to vector<1x128xf32>
    %30 = vector.extract_strided_slice %24 {offsets = [5, 0], sizes = [1, 128], strides = [1, 1]} : vector<8x128xf32> to vector<1x128xf32>
    %31 = vector.extract_strided_slice %24 {offsets = [6, 0], sizes = [1, 128], strides = [1, 1]} : vector<8x128xf32> to vector<1x128xf32>
    %32 = vector.extract_strided_slice %24 {offsets = [7, 0], sizes = [1, 128], strides = [1, 1]} : vector<8x128xf32> to vector<1x128xf32>
    %33 = math.tanh %25 : vector<1x128xf32>
    %34 = vector.extract_strided_slice %33 {offsets = [0, 32], sizes = [1, 32], strides = [1, 1]} : vector<1x128xf32> to vector<1x32xf32>
    %cst_11 = arith.constant 5.000000e-01 : f32
    %35 = vector.broadcast %cst_11 : f32 to vector<1x32xf32>
    %36 = arith.mulf %34, %35 : vector<1x32xf32>
    %cst_12 = arith.constant 5.000000e-01 : f32
    %37 = vector.broadcast %cst_12 : f32 to vector<1x32xf32>
    %38 = arith.addf %36, %37 : vector<1x32xf32>
    %39 = vector.extract_strided_slice %33 {offsets = [0, 64], sizes = [1, 32], strides = [1, 1]} : vector<1x128xf32> to vector<1x32xf32>
    %cst_13 = arith.constant 5.000000e-01 : f32
    %40 = vector.broadcast %cst_13 : f32 to vector<1x32xf32>
    %41 = arith.mulf %39, %40 : vector<1x32xf32>
    %cst_14 = arith.constant 5.000000e-01 : f32
    %42 = vector.broadcast %cst_14 : f32 to vector<1x32xf32>
    %43 = arith.addf %41, %42 : vector<1x32xf32>
    %44 = vector.extract_strided_slice %33 {offsets = [0, 96], sizes = [1, 32], strides = [1, 1]} : vector<1x128xf32> to vector<1x32xf32>
    %45 = arith.mulf %38, %44 : vector<1x32xf32>
    %46 = math.tanh %45 : vector<1x32xf32>
    %47 = arith.mulf %43, %46 : vector<1x32xf32>
    %c0_15 = arith.constant 0 : index
    %c0_16 = arith.constant 0 : index
    %c0_17 = arith.constant 0 : index
    %48 = vector.load %arg5[%c0_15, %c0_16, %c0_17] : memref<1x8x32xf32, #tpu.memory_space<vmem>>, vector<1x1x32xf32>
    %49 = vector.shape_cast %48 : vector<1x1x32xf32> to vector<1x32xf32>
    %50 = vector.shape_cast %47 : vector<1x32xf32> to vector<1x1x32xf32>
    tpu.vector_store %arg5[%c0_15, %c0_16, %c0_17], %50 {strides = array<i32>} : memref<1x8x32xf32, #tpu.memory_space<vmem>>, vector<1x1x32xf32>,
    %51 = arith.truncf %47 : vector<1x32xf32> to vector<1x32xbf16>
    %cst_18 = arith.constant dense<0.000000e+00> : vector<1x128xf32>
    %52 = tpu.matmul %51, %13, %cst_18 {dimension_numbers = #tpu.dot_dimension_numbers<[1], [0], [0], [1], [0, 0, 1, 1], [], []>} : vector<1x32xbf16>, vector<32x128xbf16>, vector<1x128xf32> -> vector<1x128xf32>
    %53 = arith.addf %52, %26 : vector<1x128xf32>
    %54 = math.tanh %53 : vector<1x128xf32>
    %55 = vector.extract_strided_slice %54 {offsets = [0, 32], sizes = [1, 32], strides = [1, 1]} : vector<1x128xf32> to vector<1x32xf32>
    %cst_19 = arith.constant 5.000000e-01 : f32
    %56 = vector.broadcast %cst_19 : f32 to vector<1x32xf32>
    %57 = arith.mulf %55, %56 : vector<1x32xf32>
    %cst_20 = arith.constant 5.000000e-01 : f32
    %58 = vector.broadcast %cst_20 : f32 to vector<1x32xf32>
    %59 = arith.addf %57, %58 : vector<1x32xf32>
    %60 = vector.extract_strided_slice %54 {offsets = [0, 64], sizes = [1, 32], strides = [1, 1]} : vector<1x128xf32> to vector<1x32xf32>
    %cst_21 = arith.constant 5.000000e-01 : f32
    %61 = vector.broadcast %cst_21 : f32 to vector<1x32xf32>
    %62 = arith.mulf %60, %61 : vector<1x32xf32>
    %cst_22 = arith.constant 5.000000e-01 : f32
    %63 = vector.broadcast %cst_22 : f32 to vector<1x32xf32>
    %64 = arith.addf %62, %63 : vector<1x32xf32>
    %65 = vector.extract_strided_slice %54 {offsets = [0, 96], sizes = [1, 32], strides = [1, 1]} : vector<1x128xf32> to vector<1x32xf32>
    %66 = arith.mulf %59, %65 : vector<1x32xf32>
    %67 = math.tanh %66 : vector<1x32xf32>
    %68 = arith.mulf %64, %67 : vector<1x32xf32>
    %c0_23 = arith.constant 0 : index
    %c1 = arith.constant 1 : index
    %c0_24 = arith.constant 0 : index
    %69 = vector.load %arg5[%c0_23, %c1, %c0_24] : memref<1x8x32xf32, #tpu.memory_space<vmem>>, vector<1x1x32xf32>
    %70 = vector.shape_cast %69 : vector<1x1x32xf32> to vector<1x32xf32>
    %71 = vector.shape_cast %68 : vector<1x32xf32> to vector<1x1x32xf32>
    tpu.vector_store %arg5[%c0_23, %c1, %c0_24], %71 {strides = array<i32>} : memref<1x8x32xf32, #tpu.memory_space<vmem>>, vector<1x1x32xf32>,
    %72 = arith.truncf %68 : vector<1x32xf32> to vector<1x32xbf16>
    %cst_25 = arith.constant dense<0.000000e+00> : vector<1x128xf32>
    %73 = tpu.matmul %72, %13, %cst_25 {dimension_numbers = #tpu.dot_dimension_numbers<[1], [0], [0], [1], [0, 0, 1, 1], [], []>} : vector<1x32xbf16>, vector<32x128xbf16>, vector<1x128xf32> -> vector<1x128xf32>
    %74 = arith.addf %73, %27 : vector<1x128xf32>
    %75 = math.tanh %74 : vector<1x128xf32>
    %76 = vector.extract_strided_slice %75 {offsets = [0, 32], sizes = [1, 32], strides = [1, 1]} : vector<1x128xf32> to vector<1x32xf32>
    %cst_26 = arith.constant 5.000000e-01 : f32
    %77 = vector.broadcast %cst_26 : f32 to vector<1x32xf32>
    %78 = arith.mulf %76, %77 : vector<1x32xf32>
    %cst_27 = arith.constant 5.000000e-01 : f32
    %79 = vector.broadcast %cst_27 : f32 to vector<1x32xf32>
    %80 = arith.addf %78, %79 : vector<1x32xf32>
    %81 = vector.extract_strided_slice %75 {offsets = [0, 64], sizes = [1, 32], strides = [1, 1]} : vector<1x128xf32> to vector<1x32xf32>
    %cst_28 = arith.constant 5.000000e-01 : f32
    %82 = vector.broadcast %cst_28 : f32 to vector<1x32xf32>
    %83 = arith.mulf %81, %82 : vector<1x32xf32>
    %cst_29 = arith.constant 5.000000e-01 : f32
    %84 = vector.broadcast %cst_29 : f32 to vector<1x32xf32>
    %85 = arith.addf %83, %84 : vector<1x32xf32>
    %86 = vector.extract_strided_slice %75 {offsets = [0, 96], sizes = [1, 32], strides = [1, 1]} : vector<1x128xf32> to vector<1x32xf32>
    %87 = arith.mulf %80, %86 : vector<1x32xf32>
    %88 = math.tanh %87 : vector<1x32xf32>
    %89 = arith.mulf %85, %88 : vector<1x32xf32>
    %c0_30 = arith.constant 0 : index
    %c2 = arith.constant 2 : index
    %c0_31 = arith.constant 0 : index
    %90 = vector.load %arg5[%c0_30, %c2, %c0_31] : memref<1x8x32xf32, #tpu.memory_space<vmem>>, vector<1x1x32xf32>
    %91 = vector.shape_cast %90 : vector<1x1x32xf32> to vector<1x32xf32>
    %92 = vector.shape_cast %89 : vector<1x32xf32> to vector<1x1x32xf32>
    tpu.vector_store %arg5[%c0_30, %c2, %c0_31], %92 {strides = array<i32>} : memref<1x8x32xf32, #tpu.memory_space<vmem>>, vector<1x1x32xf32>,
    %93 = arith.truncf %89 : vector<1x32xf32> to vector<1x32xbf16>
    %cst_32 = arith.constant dense<0.000000e+00> : vector<1x128xf32>
    %94 = tpu.matmul %93, %13, %cst_32 {dimension_numbers = #tpu.dot_dimension_numbers<[1], [0], [0], [1], [0, 0, 1, 1], [], []>} : vector<1x32xbf16>, vector<32x128xbf16>, vector<1x128xf32> -> vector<1x128xf32>
    %95 = arith.addf %94, %28 : vector<1x128xf32>
    %96 = math.tanh %95 : vector<1x128xf32>
    %97 = vector.extract_strided_slice %96 {offsets = [0, 32], sizes = [1, 32], strides = [1, 1]} : vector<1x128xf32> to vector<1x32xf32>
    %cst_33 = arith.constant 5.000000e-01 : f32
    %98 = vector.broadcast %cst_33 : f32 to vector<1x32xf32>
    %99 = arith.mulf %97, %98 : vector<1x32xf32>
    %cst_34 = arith.constant 5.000000e-01 : f32
    %100 = vector.broadcast %cst_34 : f32 to vector<1x32xf32>
    %101 = arith.addf %99, %100 : vector<1x32xf32>
    %102 = vector.extract_strided_slice %96 {offsets = [0, 64], sizes = [1, 32], strides = [1, 1]} : vector<1x128xf32> to vector<1x32xf32>
    %cst_35 = arith.constant 5.000000e-01 : f32
    %103 = vector.broadcast %cst_35 : f32 to vector<1x32xf32>
    %104 = arith.mulf %102, %103 : vector<1x32xf32>
    %cst_36 = arith.constant 5.000000e-01 : f32
    %105 = vector.broadcast %cst_36 : f32 to vector<1x32xf32>
    %106 = arith.addf %104, %105 : vector<1x32xf32>
    %107 = vector.extract_strided_slice %96 {offsets = [0, 96], sizes = [1, 32], strides = [1, 1]} : vector<1x128xf32> to vector<1x32xf32>
    %108 = arith.mulf %101, %107 : vector<1x32xf32>
    %109 = math.tanh %108 : vector<1x32xf32>
    %110 = arith.mulf %106, %109 : vector<1x32xf32>
    %c0_37 = arith.constant 0 : index
    %c3 = arith.constant 3 : index
    %c0_38 = arith.constant 0 : index
    %111 = vector.load %arg5[%c0_37, %c3, %c0_38] : memref<1x8x32xf32, #tpu.memory_space<vmem>>, vector<1x1x32xf32>
    %112 = vector.shape_cast %111 : vector<1x1x32xf32> to vector<1x32xf32>
    %113 = vector.shape_cast %110 : vector<1x32xf32> to vector<1x1x32xf32>
    tpu.vector_store %arg5[%c0_37, %c3, %c0_38], %113 {strides = array<i32>} : memref<1x8x32xf32, #tpu.memory_space<vmem>>, vector<1x1x32xf32>,
    %114 = arith.truncf %110 : vector<1x32xf32> to vector<1x32xbf16>
    %cst_39 = arith.constant dense<0.000000e+00> : vector<1x128xf32>
    %115 = tpu.matmul %114, %13, %cst_39 {dimension_numbers = #tpu.dot_dimension_numbers<[1], [0], [0], [1], [0, 0, 1, 1], [], []>} : vector<1x32xbf16>, vector<32x128xbf16>, vector<1x128xf32> -> vector<1x128xf32>
    %116 = arith.addf %115, %29 : vector<1x128xf32>
    %117 = math.tanh %116 : vector<1x128xf32>
    %118 = vector.extract_strided_slice %117 {offsets = [0, 32], sizes = [1, 32], strides = [1, 1]} : vector<1x128xf32> to vector<1x32xf32>
    %cst_40 = arith.constant 5.000000e-01 : f32
    %119 = vector.broadcast %cst_40 : f32 to vector<1x32xf32>
    %120 = arith.mulf %118, %119 : vector<1x32xf32>
    %cst_41 = arith.constant 5.000000e-01 : f32
    %121 = vector.broadcast %cst_41 : f32 to vector<1x32xf32>
    %122 = arith.addf %120, %121 : vector<1x32xf32>
    %123 = vector.extract_strided_slice %117 {offsets = [0, 64], sizes = [1, 32], strides = [1, 1]} : vector<1x128xf32> to vector<1x32xf32>
    %cst_42 = arith.constant 5.000000e-01 : f32
    %124 = vector.broadcast %cst_42 : f32 to vector<1x32xf32>
    %125 = arith.mulf %123, %124 : vector<1x32xf32>
    %cst_43 = arith.constant 5.000000e-01 : f32
    %126 = vector.broadcast %cst_43 : f32 to vector<1x32xf32>
    %127 = arith.addf %125, %126 : vector<1x32xf32>
    %128 = vector.extract_strided_slice %117 {offsets = [0, 96], sizes = [1, 32], strides = [1, 1]} : vector<1x128xf32> to vector<1x32xf32>
    %129 = arith.mulf %122, %128 : vector<1x32xf32>
    %130 = math.tanh %129 : vector<1x32xf32>
    %131 = arith.mulf %127, %130 : vector<1x32xf32>
    %c0_44 = arith.constant 0 : index
    %c4 = arith.constant 4 : index
    %c0_45 = arith.constant 0 : index
    %132 = vector.load %arg5[%c0_44, %c4, %c0_45] : memref<1x8x32xf32, #tpu.memory_space<vmem>>, vector<1x1x32xf32>
    %133 = vector.shape_cast %132 : vector<1x1x32xf32> to vector<1x32xf32>
    %134 = vector.shape_cast %131 : vector<1x32xf32> to vector<1x1x32xf32>
    tpu.vector_store %arg5[%c0_44, %c4, %c0_45], %134 {strides = array<i32>} : memref<1x8x32xf32, #tpu.memory_space<vmem>>, vector<1x1x32xf32>,
    %135 = arith.truncf %131 : vector<1x32xf32> to vector<1x32xbf16>
    %cst_46 = arith.constant dense<0.000000e+00> : vector<1x128xf32>
    %136 = tpu.matmul %135, %13, %cst_46 {dimension_numbers = #tpu.dot_dimension_numbers<[1], [0], [0], [1], [0, 0, 1, 1], [], []>} : vector<1x32xbf16>, vector<32x128xbf16>, vector<1x128xf32> -> vector<1x128xf32>
    %137 = arith.addf %136, %30 : vector<1x128xf32>
    %138 = math.tanh %137 : vector<1x128xf32>
    %139 = vector.extract_strided_slice %138 {offsets = [0, 32], sizes = [1, 32], strides = [1, 1]} : vector<1x128xf32> to vector<1x32xf32>
    %cst_47 = arith.constant 5.000000e-01 : f32
    %140 = vector.broadcast %cst_47 : f32 to vector<1x32xf32>
    %141 = arith.mulf %139, %140 : vector<1x32xf32>
    %cst_48 = arith.constant 5.000000e-01 : f32
    %142 = vector.broadcast %cst_48 : f32 to vector<1x32xf32>
    %143 = arith.addf %141, %142 : vector<1x32xf32>
    %144 = vector.extract_strided_slice %138 {offsets = [0, 64], sizes = [1, 32], strides = [1, 1]} : vector<1x128xf32> to vector<1x32xf32>
    %cst_49 = arith.constant 5.000000e-01 : f32
    %145 = vector.broadcast %cst_49 : f32 to vector<1x32xf32>
    %146 = arith.mulf %144, %145 : vector<1x32xf32>
    %cst_50 = arith.constant 5.000000e-01 : f32
    %147 = vector.broadcast %cst_50 : f32 to vector<1x32xf32>
    %148 = arith.addf %146, %147 : vector<1x32xf32>
    %149 = vector.extract_strided_slice %138 {offsets = [0, 96], sizes = [1, 32], strides = [1, 1]} : vector<1x128xf32> to vector<1x32xf32>
    %150 = arith.mulf %143, %149 : vector<1x32xf32>
    %151 = math.tanh %150 : vector<1x32xf32>
    %152 = arith.mulf %148, %151 : vector<1x32xf32>
    %c0_51 = arith.constant 0 : index
    %c5 = arith.constant 5 : index
    %c0_52 = arith.constant 0 : index
    %153 = vector.load %arg5[%c0_51, %c5, %c0_52] : memref<1x8x32xf32, #tpu.memory_space<vmem>>, vector<1x1x32xf32>
    %154 = vector.shape_cast %153 : vector<1x1x32xf32> to vector<1x32xf32>
    %155 = vector.shape_cast %152 : vector<1x32xf32> to vector<1x1x32xf32>
    tpu.vector_store %arg5[%c0_51, %c5, %c0_52], %155 {strides = array<i32>} : memref<1x8x32xf32, #tpu.memory_space<vmem>>, vector<1x1x32xf32>,
    %156 = arith.truncf %152 : vector<1x32xf32> to vector<1x32xbf16>
    %cst_53 = arith.constant dense<0.000000e+00> : vector<1x128xf32>
    %157 = tpu.matmul %156, %13, %cst_53 {dimension_numbers = #tpu.dot_dimension_numbers<[1], [0], [0], [1], [0, 0, 1, 1], [], []>} : vector<1x32xbf16>, vector<32x128xbf16>, vector<1x128xf32> -> vector<1x128xf32>
    %158 = arith.addf %157, %31 : vector<1x128xf32>
    %159 = math.tanh %158 : vector<1x128xf32>
    %160 = vector.extract_strided_slice %159 {offsets = [0, 32], sizes = [1, 32], strides = [1, 1]} : vector<1x128xf32> to vector<1x32xf32>
    %cst_54 = arith.constant 5.000000e-01 : f32
    %161 = vector.broadcast %cst_54 : f32 to vector<1x32xf32>
    %162 = arith.mulf %160, %161 : vector<1x32xf32>
    %cst_55 = arith.constant 5.000000e-01 : f32
    %163 = vector.broadcast %cst_55 : f32 to vector<1x32xf32>
    %164 = arith.addf %162, %163 : vector<1x32xf32>
    %165 = vector.extract_strided_slice %159 {offsets = [0, 64], sizes = [1, 32], strides = [1, 1]} : vector<1x128xf32> to vector<1x32xf32>
    %cst_56 = arith.constant 5.000000e-01 : f32
    %166 = vector.broadcast %cst_56 : f32 to vector<1x32xf32>
    %167 = arith.mulf %165, %166 : vector<1x32xf32>
    %cst_57 = arith.constant 5.000000e-01 : f32
    %168 = vector.broadcast %cst_57 : f32 to vector<1x32xf32>
    %169 = arith.addf %167, %168 : vector<1x32xf32>
    %170 = vector.extract_strided_slice %159 {offsets = [0, 96], sizes = [1, 32], strides = [1, 1]} : vector<1x128xf32> to vector<1x32xf32>
    %171 = arith.mulf %164, %170 : vector<1x32xf32>
    %172 = math.tanh %171 : vector<1x32xf32>
    %173 = arith.mulf %169, %172 : vector<1x32xf32>
    %c0_58 = arith.constant 0 : index
    %c6 = arith.constant 6 : index
    %c0_59 = arith.constant 0 : index
    %174 = vector.load %arg5[%c0_58, %c6, %c0_59] : memref<1x8x32xf32, #tpu.memory_space<vmem>>, vector<1x1x32xf32>
    %175 = vector.shape_cast %174 : vector<1x1x32xf32> to vector<1x32xf32>
    %176 = vector.shape_cast %173 : vector<1x32xf32> to vector<1x1x32xf32>
    tpu.vector_store %arg5[%c0_58, %c6, %c0_59], %176 {strides = array<i32>} : memref<1x8x32xf32, #tpu.memory_space<vmem>>, vector<1x1x32xf32>,
    %177 = arith.truncf %173 : vector<1x32xf32> to vector<1x32xbf16>
    %cst_60 = arith.constant dense<0.000000e+00> : vector<1x128xf32>
    %178 = tpu.matmul %177, %13, %cst_60 {dimension_numbers = #tpu.dot_dimension_numbers<[1], [0], [0], [1], [0, 0, 1, 1], [], []>} : vector<1x32xbf16>, vector<32x128xbf16>, vector<1x128xf32> -> vector<1x128xf32>
    %179 = arith.addf %178, %32 : vector<1x128xf32>
    %180 = math.tanh %179 : vector<1x128xf32>
    %181 = vector.extract_strided_slice %180 {offsets = [0, 32], sizes = [1, 32], strides = [1, 1]} : vector<1x128xf32> to vector<1x32xf32>
    %cst_61 = arith.constant 5.000000e-01 : f32
    %182 = vector.broadcast %cst_61 : f32 to vector<1x32xf32>
    %183 = arith.mulf %181, %182 : vector<1x32xf32>
    %cst_62 = arith.constant 5.000000e-01 : f32
    %184 = vector.broadcast %cst_62 : f32 to vector<1x32xf32>
    %185 = arith.addf %183, %184 : vector<1x32xf32>
    %186 = vector.extract_strided_slice %180 {offsets = [0, 64], sizes = [1, 32], strides = [1, 1]} : vector<1x128xf32> to vector<1x32xf32>
    %cst_63 = arith.constant 5.000000e-01 : f32
    %187 = vector.broadcast %cst_63 : f32 to vector<1x32xf32>
    %188 = arith.mulf %186, %187 : vector<1x32xf32>
    %cst_64 = arith.constant 5.000000e-01 : f32
    %189 = vector.broadcast %cst_64 : f32 to vector<1x32xf32>
    %190 = arith.addf %188, %189 : vector<1x32xf32>
    %191 = vector.extract_strided_slice %180 {offsets = [0, 96], sizes = [1, 32], strides = [1, 1]} : vector<1x128xf32> to vector<1x32xf32>
    %192 = arith.mulf %185, %191 : vector<1x32xf32>
    %193 = math.tanh %192 : vector<1x32xf32>
    %194 = arith.mulf %190, %193 : vector<1x32xf32>
    %c0_65 = arith.constant 0 : index
    %c7 = arith.constant 7 : index
    %c0_66 = arith.constant 0 : index
    %195 = vector.load %arg5[%c0_65, %c7, %c0_66] : memref<1x8x32xf32, #tpu.memory_space<vmem>>, vector<1x1x32xf32>
    %196 = vector.shape_cast %195 : vector<1x1x32xf32> to vector<1x32xf32>
    %197 = vector.shape_cast %194 : vector<1x32xf32> to vector<1x1x32xf32>
    tpu.vector_store %arg5[%c0_65, %c7, %c0_66], %197 {strides = array<i32>} : memref<1x8x32xf32, #tpu.memory_space<vmem>>, vector<1x1x32xf32>,
    return
  }
  func.func @transform_0(%arg0: i32) -> (i32, i32, i32) {
    %c0_i32 = arith.constant 0 : i32
    %c0_i32_0 = arith.constant 0 : i32
    %c0_i32_1 = arith.constant 0 : i32
    return %arg0, %c0_i32, %c0_i32_0 : i32, i32, i32
  }
  func.func @transform_1(%arg0: i32) -> (i32, i32) {
    %c0_i32 = arith.constant 0 : i32
    %c0_i32_0 = arith.constant 0 : i32
    %c0_i32_1 = arith.constant 0 : i32
    return %c0_i32, %c0_i32_0 : i32, i32
  }
  func.func @transform_2(%arg0: i32) -> (i32, i32) {
    %c0_i32 = arith.constant 0 : i32
    %c0_i32_0 = arith.constant 0 : i32
    %c0_i32_1 = arith.constant 0 : i32
    return %c0_i32, %c0_i32_0 : i32, i32
  }
  func.func @transform_3(%arg0: i32) -> (i32, i32) {
    %c0_i32 = arith.constant 0 : i32
    %c0_i32_0 = arith.constant 0 : i32
    %c0_i32_1 = arith.constant 0 : i32
    return %c0_i32, %c0_i32_0 : i32, i32
  }
  func.func @transform_4(%arg0: i32) -> (i32, i32, i32) {
    %c0_i32 = arith.constant 0 : i32
    %c0_i32_0 = arith.constant 0 : i32
    %c0_i32_1 = arith.constant 0 : i32
    return %arg0, %c0_i32, %c0_i32_0 : i32, i32, i32
  }
}

</mosaic_0001>

<llo_original>
// kernel: tpu_custom_call.1
$region0: #{tpu_custom_call.1}
  #allocation0 [shape = 'u32[]', space=smem, size = 0x4, offset = 0x4, fixed_abs, tag = 'smem constant byte address 0x4 - core index']
  #allocation1 [shape = 'u32[144,128]{1,0:T(1,128)}', space=vmem, size = 0x12000, scoped, tag = 'internal scratch']
  %s0 = inlined_call_operand.hbm [shape: f32[4,8,32], index: 0, kind: input, shape index: {}]
  %s1 = inlined_call_operand.hbm [shape: f32[32,128], index: 1, kind: input, shape index: {}]
  %s2 = inlined_call_operand.hbm [shape: f32[32,128], index: 2, kind: input, shape index: {}]
  %s3 = inlined_call_operand.vmem [shape: f32[1,128], index: 3, kind: input, shape index: {}]
  %s4 = inlined_call_operand.hbm [shape: f32[4,8,32], index: 4, kind: output, shape index: {}]
  %s5 = sld [smem:[#allocation0]]
  $region61: #{tpu_custom_call.1} parent=0
    _
  %s7 = ssub.s32 1, %s5
  %s8 = scalar_select 0, %s7, %s5
  $region1: #{tpu_custom_call.1} parent=0
    #allocation2 [shape = 'u8[8192]{0}', space=vmem, size = 0x2000, scoped, tag = 'input window, operand 0']
    #allocation3 [shape = 's32[2]{0}', space=sflag, size = 0x8, scoped, tag = 'scoped memory for tpu_custom_call.1']
    #allocation4 [shape = 's32[2]{0}', space=sflag, size = 0x8, scoped, tag = 'scoped memory for tpu_custom_call.1']
    #allocation5 [shape = 'u8[16384]{0}', space=vmem, size = 0x4000, scoped, tag = 'input window, operand 1, single buffered']
    #allocation6 [shape = 's32[1]{0}', space=sflag, size = 0x4, scoped, tag = 'scoped memory for tpu_custom_call.1']
    #allocation7 [shape = 'u8[16384]{0}', space=vmem, size = 0x4000, scoped, tag = 'input window, operand 2, single buffered']
    #allocation8 [shape = 'u8[8192]{0}', space=vmem, size = 0x2000, scoped, tag = 'output window, operand 0']
    %9 = vsyncpa [#allocation3], 0
    %s10 = scalar_lea.sflag [#allocation3], 1
    %11 = vsyncpa %s10, 0
    %12 = vsyncpa [#allocation6], 0
    %13 = vsyncpa [#allocation4], 0
    %s14 = scalar_lea.sflag [#allocation4], 1
    %15 = vsyncpa %s14, 0
    loop: start=0, step=1, limit=6
    $region2: #{tpu_custom_call.1} parent=1 // loop_pre_header
      _
    $region3: #{tpu_custom_call.1} parent=1 // loop_header
      %s17 = sphi 0, %s21
      %p18 = scmp.ge.s32.totalorder %s17, 6
      %s27 = sphi 0, %s29
      %s30 = sphi 0, %s27
      %s31 = sphi 0, %s30
      %s47 = sphi 0, %s31
      %s51 = sphi 0, %s51
      %s53 = sphi 0, %s51
      %s54 = sphi 0, %s53
      %s68 = sphi 0, %s54
      %s72 = sphi 0, %s72
      %s74 = sphi 0, %s72
      %s75 = sphi 0, %s74
      %s89 = sphi 0, %s75
      %s93 = sphi 0, %s93
      %s95 = sphi 0, %s93
      %s96 = sphi 0, %s95
      %s110 = sphi 0, %s96
      %s116 = sphi 0, %s118
      %s119 = sphi 0, %s116
      %s120 = sphi 0, %s119
      %s136 = sphi 0, %s120
    $region4: #{tpu_custom_call.1} parent=1 // loop_header_branch
      %20 = sbr.rel (%p18) target = $region8
    $region5: #{tpu_custom_call.1} parent=1 // loop_body
      %s22 = ssub.s32 %s17, 1
      %s23 = ssub.s32 %s17, 2
      %s24 = sadd.s32 %s17, 1
      %s25 = ssub.s32 %s17, %s24
      %p26 = scmp.eq.s32.totalorder %s25, 0
      %s28 = sadd.s32 %s27, 1
      %s29 = scalar_select %p26, %s27, %s28
      %p32 = pneg %p26
      %p33 = scmp.eq.s32.totalorder %s17, 3
      %p34 = por %p32, %p33
      %p35 = scmp.ne.s32.totalorder %s27, %s30
      %p36 = scmp.eq.s32.totalorder %s17, 0
      %p37 = por %p35, %p36
      %p38 = scmp.ne.s32.totalorder %s27, %s30
      %p39 = scmp.eq.s32.totalorder %s22, 3
      %p40 = por %p38, %p39
      %p41 = scmp.ne.s32.totalorder %s30, %s31
      %p42 = scmp.eq.s32.totalorder %s22, 0
      %p43 = por %p41, %p42
      %p44 = scmp.ne.s32.totalorder %s30, %s31
      %p45 = scmp.eq.s32.totalorder %s23, 3
      %p46 = por %p44, %p45
      %p48 = scmp.ne.s32.totalorder %s31, %s47
      %p49 = scmp.eq.s32.totalorder %s23, 0
      %p50 = por %p48, %p49
      %s52 = sadd.s32 %s51, 1
      %p55 = scmp.eq.s32.totalorder %s17, 3
      %p56 = scmp.ne.s32.totalorder %s51, %s53
      %p57 = scmp.eq.s32.totalorder %s17, 0
      %p58 = por %p56, %p57
      %p59 = scmp.ne.s32.totalorder %s51, %s53
      %p60 = scmp.eq.s32.totalorder %s22, 3
      %p61 = por %p59, %p60
      %p62 = scmp.ne.s32.totalorder %s53, %s54
      %p63 = scmp.eq.s32.totalorder %s22, 0
      %p64 = por %p62, %p63
      %p65 = scmp.ne.s32.totalorder %s53, %s54
      %p66 = scmp.eq.s32.totalorder %s23, 3
      %p67 = por %p65, %p66
      %p69 = scmp.ne.s32.totalorder %s54, %s68
      %p70 = scmp.eq.s32.totalorder %s23, 0
      %p71 = por %p69, %p70
      %s73 = sadd.s32 %s72, 1
      %p76 = scmp.eq.s32.totalorder %s17, 3
      %p77 = scmp.ne.s32.totalorder %s72, %s74
      %p78 = scmp.eq.s32.totalorder %s17, 0
      %p79 = por %p77, %p78
      %p80 = scmp.ne.s32.totalorder %s72, %s74
      %p81 = scmp.eq.s32.totalorder %s22, 3
      %p82 = por %p80, %p81
      %p83 = scmp.ne.s32.totalorder %s74, %s75
      %p84 = scmp.eq.s32.totalorder %s22, 0
      %p85 = por %p83, %p84
      %p86 = scmp.ne.s32.totalorder %s74, %s75
      %p87 = scmp.eq.s32.totalorder %s23, 3
      %p88 = por %p86, %p87
      %p90 = scmp.ne.s32.totalorder %s75, %s89
      %p91 = scmp.eq.s32.totalorder %s23, 0
      %p92 = por %p90, %p91
      %s94 = sadd.s32 %s93, 1
      %p97 = scmp.eq.s32.totalorder %s17, 3
      %p98 = scmp.ne.s32.totalorder %s93, %s95
      %p99 = scmp.eq.s32.totalorder %s17, 0
      %p100 = por %p98, %p99
      %p101 = scmp.ne.s32.totalorder %s93, %s95
      %p102 = scmp.eq.s32.totalorder %s22, 3
      %p103 = por %p101, %p102
      %p104 = scmp.ne.s32.totalorder %s95, %s96
      %p105 = scmp.eq.s32.totalorder %s22, 0
      %p106 = por %p104, %p105
      %p107 = scmp.ne.s32.totalorder %s95, %s96
      %p108 = scmp.eq.s32.totalorder %s23, 3
      %p109 = por %p107, %p108
      %p111 = scmp.ne.s32.totalorder %s96, %s110
      %p112 = scmp.eq.s32.totalorder %s23, 0
      %p113 = por %p111, %p112
      %s114 = ssub.s32 %s17, %s24
      %p115 = scmp.eq.s32.totalorder %s114, 0
      %s117 = sadd.s32 %s116, 1
      %s118 = scalar_select %p115, %s116, %s117
      %p121 = pneg %p115
      %p122 = scmp.eq.s32.totalorder %s17, 3
      %p123 = por %p121, %p122
      %p124 = scmp.ne.s32.totalorder %s116, %s119
      %p125 = scmp.eq.s32.totalorder %s17, 0
      %p126 = por %p124, %p125
      %p127 = scmp.ne.s32.totalorder %s116, %s119
      %p128 = scmp.eq.s32.totalorder %s22, 3
      %p129 = por %p127, %p128
      %p130 = scmp.ne.s32.totalorder %s119, %s120
      %p131 = scmp.eq.s32.totalorder %s22, 0
      %p132 = por %p130, %p131
      %p133 = scmp.ne.s32.totalorder %s119, %s120
      %p134 = scmp.eq.s32.totalorder %s23, 3
      %p135 = por %p133, %p134
      %p137 = scmp.ne.s32.totalorder %s120, %s136
      %p138 = scmp.eq.s32.totalorder %s23, 0
      %p139 = por %p137, %p138
      %p140 = scmp.le.s32.totalorder 1, %s17
      %p141 = scmp.lt.s32.totalorder %s17, 5
      %p142 = pnand %p140, %p141
      %p143 = pneg %p142
      // Predicated region
      $region9: #{tpu_custom_call.1} parent=5 // pred_check
        _
      $region10: #{tpu_custom_call.1} parent=5 // pred_check_branch
        %145 = sbr.rel (%p142) target = $region12
      $region11: #{tpu_custom_call.1} parent=5 // pred_region
        %s146 = ssub.s32 %s17, 1
        // Predicated region
        $region13: #{tpu_custom_call.1} parent=11 // pred_check
          %p147 = pneg %p64
        $region14: #{tpu_custom_call.1} parent=11 // pred_check_branch
          %149 = sbr.rel (%p147) target = $region16
        $region15: #{tpu_custom_call.1} parent=11 // pred_region
          %s151 = ssub.s32 512, 512
          %152 = vsyncadd [#allocation6], %s151
          %s153 = sshll.u32 [#allocation5], 4
          %s154 = int_to_ptr.vmem [resolvable:$true] %s153
          %159 = dma.hbm_to_vmem [thread:$0]  %s1, 512, %s154, [#allocation6], 128, 128, 8
        $region16: #{tpu_custom_call.1} parent=11 // pred_fallthru
          _
        // Predicated region
        $region17: #{tpu_custom_call.1} parent=11 // pred_check
          %p160 = pneg %p85
        $region18: #{tpu_custom_call.1} parent=11 // pred_check_branch
          %162 = sbr.rel (%p160) target = $region20
        $region19: #{tpu_custom_call.1} parent=11 // pred_region
          %s164 = ssub.s32 512, 512
          %165 = vsyncadd [#allocation6], %s164
          %s166 = sshll.u32 [#allocation7], 4
          %s167 = int_to_ptr.vmem [resolvable:$true] %s166
          %172 = dma.hbm_to_vmem [thread:$0]  %s2, 512, %s167, [#allocation6], 128, 128, 8
        $region20: #{tpu_custom_call.1} parent=11 // pred_fallthru
          _
        // Predicated region
        $region21: #{tpu_custom_call.1} parent=11 // pred_check
          %p173 = pneg %p106
        $region22: #{tpu_custom_call.1} parent=11 // pred_check_branch
          %175 = sbr.rel (%p173) target = $region24
        $region23: #{tpu_custom_call.1} parent=11 // pred_region
          _
        $region24: #{tpu_custom_call.1} parent=11 // pred_fallthru
          _
      $region12: #{tpu_custom_call.1} parent=5 // pred_fallthru
        _
      %p176 = scmp.lt.s32.totalorder %s17, 4
      // Predicated region
      $region25: #{tpu_custom_call.1} parent=5 // pred_check
        %p177 = pneg %p176
      $region26: #{tpu_custom_call.1} parent=5 // pred_check_branch
        %179 = sbr.rel (%p177) target = $region28
      $region27: #{tpu_custom_call.1} parent=5 // pred_region
        // Predicated region
        $region29: #{tpu_custom_call.1} parent=27 // pred_check
          %p180 = pneg %p37
        $region30: #{tpu_custom_call.1} parent=27 // pred_check_branch
          %182 = sbr.rel (%p180) target = $region32
        $region31: #{tpu_custom_call.1} parent=27 // pred_region
          %s183 = sand.u32 %s27, 1
          %s184 = scalar_lea.sflag [#allocation3], %s183
          %s185 = sand.u32 %s27, 1
          %s186 = smul.addr %s185, 8
          %s187 = scalar_lea.vmem [#allocation2], %s186
          %s189 = ssub.s32 128, 128
          %190 = vsyncadd %s184, %s189
          %s191 = smul.addr %s17, 128
          %s192 = scalar_lea.hbm %s0, %s191
          %s194 = sshll.u32 %s187, 4
          %s195 = int_to_ptr.vmem [resolvable:$true] %s194
          %197 = dma.hbm_to_vmem [thread:$0]  %s192, 128, %s195, %s184
        $region32: #{tpu_custom_call.1} parent=27 // pred_fallthru
          _
      $region28: #{tpu_custom_call.1} parent=5 // pred_fallthru
        _
      %p198 = scmp.le.s32.totalorder 1, %s17
      %p199 = scmp.lt.s32.totalorder %s17, 5
      %p200 = pnand %p198, %p199
      %p201 = pneg %p200
      // Predicated region
      $region33: #{tpu_custom_call.1} parent=5 // pred_check
        _
      $region34: #{tpu_custom_call.1} parent=5 // pred_check_branch
        %203 = sbr.rel (%p200) target = $region36
      $region35: #{tpu_custom_call.1} parent=5 // pred_region
        %s204 = ssub.s32 %s17, 1
        %s205 = sand.u32 %s30, 1
        %s206 = scalar_lea.sflag [#allocation3], %s205
        %s207 = sand.u32 %s30, 1
        %s208 = smul.addr %s207, 8
        %s209 = scalar_lea.vmem [#allocation2], %s208
        // Predicated region
        $region37: #{tpu_custom_call.1} parent=35 // pred_check
          %p210 = pneg %p43
        $region38: #{tpu_custom_call.1} parent=35 // pred_check_branch
          %212 = sbr.rel (%p210) target = $region40
        $region39: #{tpu_custom_call.1} parent=35 // pred_region
          %213 = dma.done %s206, 128
        $region40: #{tpu_custom_call.1} parent=35 // pred_fallthru
          _
        // Predicated region
        $region41: #{tpu_custom_call.1} parent=35 // pred_check
          %p214 = pneg %p64
        $region42: #{tpu_custom_call.1} parent=35 // pred_check_branch
          %216 = sbr.rel (%p214) target = $region44
        $region43: #{tpu_custom_call.1} parent=35 // pred_region
          %217 = dma.done [#allocation6], 512
        $region44: #{tpu_custom_call.1} parent=35 // pred_fallthru
          _
        // Predicated region
        $region45: #{tpu_custom_call.1} parent=35 // pred_check
          %p218 = pneg %p85
        $region46: #{tpu_custom_call.1} parent=35 // pred_check_branch
          %220 = sbr.rel (%p218) target = $region48
        $region47: #{tpu_custom_call.1} parent=35 // pred_region
          %221 = dma.done [#allocation6], 512
        $region48: #{tpu_custom_call.1} parent=35 // pred_fallthru
          _
        %s222 = sand.u32 %s30, 1
        %s223 = scalar_lea.sflag [#allocation3], %s222
        %s224 = sand.u32 %s30, 1
        %s225 = smul.addr %s224, 8
        %s226 = scalar_lea.vmem [#allocation2], %s225
        %p227 = pneg %p43
        %p228 = pneg %p40
        %p229 = pneg %p64
        %p230 = pneg %p61
        %p231 = pneg %p85
        %p232 = pneg %p82
        %p233 = pneg %p106
        %p234 = pneg %p103
        %p235 = pneg %p132
        %p236 = pneg %p129
        %s237 = sand.u32 %s119, 1
        %s238 = scalar_lea.sflag [#allocation4], %s237
        %s239 = sand.u32 %s119, 1
        %s240 = smul.addr %s239, 8
        %s241 = scalar_lea.vmem [#allocation8], %s240
        %v243 = vlaneseq
        %v244 = vand.u32 %v243, 127
        %vm245 = vcmp.lt.s32.totalorder %v244, 32
        %vm246 = vcmp.lt.s32.totalorder %v244, 96
        %v247 = vsel %vm246, 0.5, 1.0
        %v248 = vsel %vm245, 0.0, %v247
        %v249 = vld [vmem:[#allocation5] sm:$0xff]
        %v250 = vld [vmem:[#allocation5 + $0x8] sm:$0xff]
        %v251 = vld [vmem:[#allocation5 + $0x10] sm:$0xff]
        %v252 = vld [vmem:[#allocation5 + $0x18] sm:$0xff]
        %v253 = vmul.f32 %v249, %v248
        %v254 = vmul.f32 %v250, %v248
        %v255 = vmul.f32 %v251, %v248
        %v256 = vmul.f32 %v252, %v248
        %v257 = vpack.c.bf16 %v254, %v253
        %v258 = vpack.c.bf16 %v256, %v255
        %v259 = vld [vmem:[#allocation7] sm:$0xff]
        %v260 = vld [vmem:[#allocation7 + $0x8] sm:$0xff]
        %v261 = vld [vmem:[#allocation7 + $0x10] sm:$0xff]
        %v262 = vld [vmem:[#allocation7 + $0x18] sm:$0xff]
        %v263 = vpack.c.bf16 %v260, %v259
        %v264 = vpack.c.bf16 %v262, %v261
        %v265 = vld [vmem:[%s209] sm:$0xff]
        %v266 = vpack.c.bf16 %v265, %v265
        %v267 = vld [vmem:[%s3] sm:$0x1]
        %v269 = vlaneseq
        %v270 = vshrl.u32 %v269, 7
        %v271 = vsub.s32 0, %v270
        %v272 = vrot.slane %v267, %v271
        %vm274 = vcmask 261120
        %v276 = vsel %vm274, %v266, 0
        %278 = vmatprep.subr.bf16.mxu0 0
        %279 = vmatpush1.bf16.msra.mxu0 0
        %280 = vmatprep.subr.bf16.mxu0 0
        %281 = vmatpush1.bf16.msra.mxu0 0
        %282 = vmatprep.subr.bf16.mxu0 0
        %283 = vmatpush1.bf16.msra.mxu0 0
        %284 = vmatprep.subr.bf16.mxu0 0
        %285 = vmatpush1.bf16.msra.mxu0 0
        %286 = vmatprep.subr.bf16.mxu0 0
        %287 = vmatpush1.bf16.msra.mxu0 0
        %288 = vmatprep.subr.bf16.mxu0 0
        %289 = vmatpush1.bf16.msra.mxu0 0
        %290 = vmatprep.subr.bf16.mxu0 0
        %291 = vmatpush1.bf16.msra.mxu0 %v264
        %292 = vmatprep.subr.bf16.mxu0 0
        %293 = vmatpush1.bf16.msra.mxu0 %v263
        %294 = vmatprep.subr.bf16.mxu0 0
        %295 = vmatpush2.bf16.msra.mxu0 0
        %296 = vmatprep.subr.bf16.mxu0 0
        %297 = vmatpush2.bf16.msra.mxu0 0
        %298 = vmatprep.subr.bf16.mxu0 0
        %299 = vmatpush2.bf16.msra.mxu0 0
        %300 = vmatprep.subr.bf16.mxu0 0
        %301 = vmatpush2.bf16.msra.mxu0 0
        %302 = vmatprep.subr.bf16.mxu0 0
        %303 = vmatpush2.bf16.msra.mxu0 0
        %304 = vmatprep.subr.bf16.mxu0 0
        %305 = vmatpush2.bf16.msra.mxu0 0
        %306 = vmatprep.subr.bf16.mxu0 0
        %307 = vmatpush2.bf16.msra.mxu0 0
        %308 = vmatprep.subr.bf16.mxu0 0
        %309 = vmatpush2.bf16.msra.mxu0 0
        %310 = vmatprep.mubr.bf16.mxu0 0
        %311 = vmatmul.mubr.bf16.gmra.mxu0 %v276
        %v312 = vpop.f32.mrf.mxu0
        %v313 = vadd.f32 %v272, %v312
        %v314 = vpop.f32.mrf.mxu0
        %v315 = vpop.f32.mrf.mxu0
        %v316 = vpop.f32.mrf.mxu0
        %317 = vdwg.mxu0
        %v318 = vmul.f32 %v313, %v248
        %v319 = vtanh.pop %v318
        %v320 = vmul.f32 %v319, 0.5
        %v321 = vadd.f32 %v320, 0.5
        %323 = vrot.lane.b32.xlu0 %v319, 64
        %v324 = vpop.permute.xlu0 %323
        %v326 = vmul.f32 %v321, %v324
        %v327 = vtanh.pop %v326
        %329 = vrot.lane.b32.xlu0 %v327, 32
        %v330 = vpop.permute.xlu0 %329
        %v332 = vmul.f32 %v321, %v330
        %334 = vrot.lane.b32.xlu0 %v332, 64
        %v335 = vpop.permute.xlu0 %334
        %vm337 = vcmask 253952
        %338 = vst.msk [vmem:[%s241] sm:$0x1] %vm337, %v335
        %v339 = vpack.c.bf16 %v332, %v332
        %341 = vrot.lane.b32.xlu0 %v339, 64
        %v342 = vpop.permute.xlu0 %341
        %v344 = vrot.slane %v318, 1
        %v347 = vsel %vm274, %v342, 0
        %349 = vmatprep.subr.bf16.mxu0 0
        %350 = vmatpush1.bf16.msra.mxu0 0
        %351 = vmatprep.subr.bf16.mxu0 0
        %352 = vmatpush1.bf16.msra.mxu0 0
        %353 = vmatprep.subr.bf16.mxu0 0
        %354 = vmatpush1.bf16.msra.mxu0 0
        %355 = vmatprep.subr.bf16.mxu0 0
        %356 = vmatpush1.bf16.msra.mxu0 0
        %357 = vmatprep.subr.bf16.mxu0 0
        %358 = vmatpush1.bf16.msra.mxu0 0
        %359 = vmatprep.subr.bf16.mxu0 0
        %360 = vmatpush1.bf16.msra.mxu0 0
        %361 = vmatprep.subr.bf16.mxu0 0
        %362 = vmatpush1.bf16.msra.mxu0 %v258
        %363 = vmatprep.subr.bf16.mxu0 0
        %364 = vmatpush1.bf16.msra.mxu0 %v257
        %365 = vmatprep.subr.bf16.mxu0 0
        %366 = vmatpush2.bf16.msra.mxu0 0
        %367 = vmatprep.subr.bf16.mxu0 0
        %368 = vmatpush2.bf16.msra.mxu0 0
        %369 = vmatprep.subr.bf16.mxu0 0
        %370 = vmatpush2.bf16.msra.mxu0 0
        %371 = vmatprep.subr.bf16.mxu0 0
        %372 = vmatpush2.bf16.msra.mxu0 0
        %373 = vmatprep.subr.bf16.mxu0 0
        %374 = vmatpush2.bf16.msra.mxu0 0
        %375 = vmatprep.subr.bf16.mxu0 0
        %376 = vmatpush2.bf16.msra.mxu0 0
        %377 = vmatprep.subr.bf16.mxu0 0
        %378 = vmatpush2.bf16.msra.mxu0 0
        %379 = vmatprep.subr.bf16.mxu0 0
        %380 = vmatpush2.bf16.msra.mxu0 0
        %381 = vmatprep.mubr.bf16.mxu0 0
        %382 = vmatmul.mubr.bf16.gmra.mxu0 %v347
        %v383 = vpop.f32.mrf.mxu0
        %v384 = vadd.f32 %v344, %v383
        %v385 = vpop.f32.mrf.mxu0
        %v386 = vpop.f32.mrf.mxu0
        %v387 = vpop.f32.mrf.mxu0
        %388 = vdwg.mxu0
        %v389 = vtanh.pop %v384
        %v390 = vmul.f32 %v389, 0.5
        %v391 = vadd.f32 %v390, 0.5
        %393 = vrot.lane.b32.xlu0 %v389, 64
        %v394 = vpop.permute.xlu0 %393
        %v396 = vmul.f32 %v391, %v394
        %v397 = vtanh.pop %v396
        %399 = vrot.lane.b32.xlu0 %v397, 32
        %v400 = vpop.permute.xlu0 %399
        %v402 = vmul.f32 %v391, %v400
        %404 = vrot.lane.b32.xlu0 %v402, 64
        %v405 = vpop.permute.xlu0 %404
        %407 = vst.msk [vmem:[%s241 + $0x1] sm:$0x1] %vm337, %v405
        %v408 = vpack.c.bf16 %v402, %v402
        %410 = vrot.lane.b32.xlu0 %v408, 64
        %v411 = vpop.permute.xlu0 %410
        %v412 = vrot.slane %v318, 2
        %v415 = vsel %vm274, %v411, 0
        %417 = vmatprep.subr.bf16.mxu0 0
        %418 = vmatpush1.bf16.msra.mxu0 0
        %419 = vmatprep.subr.bf16.mxu0 0
        %420 = vmatpush1.bf16.msra.mxu0 0
        %421 = vmatprep.subr.bf16.mxu0 0
        %422 = vmatpush1.bf16.msra.mxu0 0
        %423 = vmatprep.subr.bf16.mxu0 0
        %424 = vmatpush1.bf16.msra.mxu0 0
        %425 = vmatprep.subr.bf16.mxu0 0
        %426 = vmatpush1.bf16.msra.mxu0 0
        %427 = vmatprep.subr.bf16.mxu0 0
        %428 = vmatpush1.bf16.msra.mxu0 0
        %429 = vmatprep.subr.bf16.mxu0 0
        %430 = vmatpush1.bf16.msra.mxu0 %v258
        %431 = vmatprep.subr.bf16.mxu0 0
        %432 = vmatpush1.bf16.msra.mxu0 %v257
        %433 = vmatprep.subr.bf16.mxu0 0
        %434 = vmatpush2.bf16.msra.mxu0 0
        %435 = vmatprep.subr.bf16.mxu0 0
        %436 = vmatpush2.bf16.msra.mxu0 0
        %437 = vmatprep.subr.bf16.mxu0 0
        %438 = vmatpush2.bf16.msra.mxu0 0
        %439 = vmatprep.subr.bf16.mxu0 0
        %440 = vmatpush2.bf16.msra.mxu0 0
        %441 = vmatprep.subr.bf16.mxu0 0
        %442 = vmatpush2.bf16.msra.mxu0 0
        %443 = vmatprep.subr.bf16.mxu0 0
        %444 = vmatpush2.bf16.msra.mxu0 0
        %445 = vmatprep.subr.bf16.mxu0 0
        %446 = vmatpush2.bf16.msra.mxu0 0
        %447 = vmatprep.subr.bf16.mxu0 0
        %448 = vmatpush2.bf16.msra.mxu0 0
        %449 = vmatprep.mubr.bf16.mxu0 0
        %450 = vmatmul.mubr.bf16.gmra.mxu0 %v415
        %v451 = vpop.f32.mrf.mxu0
        %v452 = vadd.f32 %v412, %v451
        %v453 = vpop.f32.mrf.mxu0
        %v454 = vpop.f32.mrf.mxu0
        %v455 = vpop.f32.mrf.mxu0
        %456 = vdwg.mxu0
        %v457 = vtanh.pop %v452
        %v458 = vmul.f32 %v457, 0.5
        %v459 = vadd.f32 %v458, 0.5
        %461 = vrot.lane.b32.xlu0 %v457, 64
        %v462 = vpop.permute.xlu0 %461
        %v464 = vmul.f32 %v459, %v462
        %v465 = vtanh.pop %v464
        %467 = vrot.lane.b32.xlu0 %v465, 32
        %v468 = vpop.permute.xlu0 %467
        %v470 = vmul.f32 %v459, %v468
        %472 = vrot.lane.b32.xlu0 %v470, 64
        %v473 = vpop.permute.xlu0 %472
        %475 = vst.msk [vmem:[%s241 + $0x2] sm:$0x1] %vm337, %v473
        %v476 = vpack.c.bf16 %v470, %v470
        %478 = vrot.lane.b32.xlu0 %v476, 64
        %v479 = vpop.permute.xlu0 %478
        %v480 = vrot.slane %v318, 3
        %v483 = vsel %vm274, %v479, 0
        %485 = vmatprep.subr.bf16.mxu0 0
        %486 = vmatpush1.bf16.msra.mxu0 0
        %487 = vmatprep.subr.bf16.mxu0 0
        %488 = vmatpush1.bf16.msra.mxu0 0
        %489 = vmatprep.subr.bf16.mxu0 0
        %490 = vmatpush1.bf16.msra.mxu0 0
        %491 = vmatprep.subr.bf16.mxu0 0
        %492 = vmatpush1.bf16.msra.mxu0 0
        %493 = vmatprep.subr.bf16.mxu0 0
        %494 = vmatpush1.bf16.msra.mxu0 0
        %495 = vmatprep.subr.bf16.mxu0 0
        %496 = vmatpush1.bf16.msra.mxu0 0
        %497 = vmatprep.subr.bf16.mxu0 0
        %498 = vmatpush1.bf16.msra.mxu0 %v258
        %499 = vmatprep.subr.bf16.mxu0 0
        %500 = vmatpush1.bf16.msra.mxu0 %v257
        %501 = vmatprep.subr.bf16.mxu0 0
        %502 = vmatpush2.bf16.msra.mxu0 0
        %503 = vmatprep.subr.bf16.mxu0 0
        %504 = vmatpush2.bf16.msra.mxu0 0
        %505 = vmatprep.subr.bf16.mxu0 0
        %506 = vmatpush2.bf16.msra.mxu0 0
        %507 = vmatprep.subr.bf16.mxu0 0
        %508 = vmatpush2.bf16.msra.mxu0 0
        %509 = vmatprep.subr.bf16.mxu0 0
        %510 = vmatpush2.bf16.msra.mxu0 0
        %511 = vmatprep.subr.bf16.mxu0 0
        %512 = vmatpush2.bf16.msra.mxu0 0
        %513 = vmatprep.subr.bf16.mxu0 0
        %514 = vmatpush2.bf16.msra.mxu0 0
        %515 = vmatprep.subr.bf16.mxu0 0
        %516 = vmatpush2.bf16.msra.mxu0 0
        %517 = vmatprep.mubr.bf16.mxu0 0
        %518 = vmatmul.mubr.bf16.gmra.mxu0 %v483
        %v519 = vpop.f32.mrf.mxu0
        %v520 = vadd.f32 %v480, %v519
        %v521 = vpop.f32.mrf.mxu0
        %v522 = vpop.f32.mrf.mxu0
        %v523 = vpop.f32.mrf.mxu0
        %524 = vdwg.mxu0
        %v525 = vtanh.pop %v520
        %v526 = vmul.f32 %v525, 0.5
        %v527 = vadd.f32 %v526, 0.5
        %529 = vrot.lane.b32.xlu0 %v525, 64
        %v530 = vpop.permute.xlu0 %529
        %v532 = vmul.f32 %v527, %v530
        %v533 = vtanh.pop %v532
        %535 = vrot.lane.b32.xlu0 %v533, 32
        %v536 = vpop.permute.xlu0 %535
        %v538 = vmul.f32 %v527, %v536
        %540 = vrot.lane.b32.xlu0 %v538, 64
        %v541 = vpop.permute.xlu0 %540
        %543 = vst.msk [vmem:[%s241 + $0x3] sm:$0x1] %vm337, %v541
        %v544 = vpack.c.bf16 %v538, %v538
        %546 = vrot.lane.b32.xlu0 %v544, 64
        %v547 = vpop.permute.xlu0 %546
        %v548 = vrot.slane %v318, 4
        %v551 = vsel %vm274, %v547, 0
        %553 = vmatprep.subr.bf16.mxu0 0
        %554 = vmatpush1.bf16.msra.mxu0 0
        %555 = vmatprep.subr.bf16.mxu0 0
        %556 = vmatpush1.bf16.msra.mxu0 0
        %557 = vmatprep.subr.bf16.mxu0 0
        %558 = vmatpush1.bf16.msra.mxu0 0
        %559 = vmatprep.subr.bf16.mxu0 0
        %560 = vmatpush1.bf16.msra.mxu0 0
        %561 = vmatprep.subr.bf16.mxu0 0
        %562 = vmatpush1.bf16.msra.mxu0 0
        %563 = vmatprep.subr.bf16.mxu0 0
        %564 = vmatpush1.bf16.msra.mxu0 0
        %565 = vmatprep.subr.bf16.mxu0 0
        %566 = vmatpush1.bf16.msra.mxu0 %v258
        %567 = vmatprep.subr.bf16.mxu0 0
        %568 = vmatpush1.bf16.msra.mxu0 %v257
        %569 = vmatprep.subr.bf16.mxu0 0
        %570 = vmatpush2.bf16.msra.mxu0 0
        %571 = vmatprep.subr.bf16.mxu0 0
        %572 = vmatpush2.bf16.msra.mxu0 0
        %573 = vmatprep.subr.bf16.mxu0 0
        %574 = vmatpush2.bf16.msra.mxu0 0
        %575 = vmatprep.subr.bf16.mxu0 0
        %576 = vmatpush2.bf16.msra.mxu0 0
        %577 = vmatprep.subr.bf16.mxu0 0
        %578 = vmatpush2.bf16.msra.mxu0 0
        %579 = vmatprep.subr.bf16.mxu0 0
        %580 = vmatpush2.bf16.msra.mxu0 0
        %581 = vmatprep.subr.bf16.mxu0 0
        %582 = vmatpush2.bf16.msra.mxu0 0
        %583 = vmatprep.subr.bf16.mxu0 0
        %584 = vmatpush2.bf16.msra.mxu0 0
        %585 = vmatprep.mubr.bf16.mxu0 0
        %586 = vmatmul.mubr.bf16.gmra.mxu0 %v551
        %v587 = vpop.f32.mrf.mxu0
        %v588 = vadd.f32 %v548, %v587
        %v589 = vpop.f32.mrf.mxu0
        %v590 = vpop.f32.mrf.mxu0
        %v591 = vpop.f32.mrf.mxu0
        %592 = vdwg.mxu0
        %v593 = vtanh.pop %v588
        %v594 = vmul.f32 %v593, 0.5
        %v595 = vadd.f32 %v594, 0.5
        %597 = vrot.lane.b32.xlu0 %v593, 64
        %v598 = vpop.permute.xlu0 %597
        %v600 = vmul.f32 %v595, %v598
        %v601 = vtanh.pop %v600
        %603 = vrot.lane.b32.xlu0 %v601, 32
        %v604 = vpop.permute.xlu0 %603
        %v606 = vmul.f32 %v595, %v604
        %608 = vrot.lane.b32.xlu0 %v606, 64
        %v609 = vpop.permute.xlu0 %608
        %611 = vst.msk [vmem:[%s241 + $0x4] sm:$0x1] %vm337, %v609
        %v612 = vpack.c.bf16 %v606, %v606
        %614 = vrot.lane.b32.xlu0 %v612, 64
        %v615 = vpop.permute.xlu0 %614
        %v616 = vrot.slane %v318, 5
        %v619 = vsel %vm274, %v615, 0
        %621 = vmatprep.subr.bf16.mxu0 0
        %622 = vmatpush1.bf16.msra.mxu0 0
        %623 = vmatprep.subr.bf16.mxu0 0
        %624 = vmatpush1.bf16.msra.mxu0 0
        %625 = vmatprep.subr.bf16.mxu0 0
        %626 = vmatpush1.bf16.msra.mxu0 0
        %627 = vmatprep.subr.bf16.mxu0 0
        %628 = vmatpush1.bf16.msra.mxu0 0
        %629 = vmatprep.subr.bf16.mxu0 0
        %630 = vmatpush1.bf16.msra.mxu0 0
        %631 = vmatprep.subr.bf16.mxu0 0
        %632 = vmatpush1.bf16.msra.mxu0 0
        %633 = vmatprep.subr.bf16.mxu0 0
        %634 = vmatpush1.bf16.msra.mxu0 %v258
        %635 = vmatprep.subr.bf16.mxu0 0
        %636 = vmatpush1.bf16.msra.mxu0 %v257
        %637 = vmatprep.subr.bf16.mxu0 0
        %638 = vmatpush2.bf16.msra.mxu0 0
        %639 = vmatprep.subr.bf16.mxu0 0
        %640 = vmatpush2.bf16.msra.mxu0 0
        %641 = vmatprep.subr.bf16.mxu0 0
        %642 = vmatpush2.bf16.msra.mxu0 0
        %643 = vmatprep.subr.bf16.mxu0 0
        %644 = vmatpush2.bf16.msra.mxu0 0
        %645 = vmatprep.subr.bf16.mxu0 0
        %646 = vmatpush2.bf16.msra.mxu0 0
        %647 = vmatprep.subr.bf16.mxu0 0
        %648 = vmatpush2.bf16.msra.mxu0 0
        %649 = vmatprep.subr.bf16.mxu0 0
        %650 = vmatpush2.bf16.msra.mxu0 0
        %651 = vmatprep.subr.bf16.mxu0 0
        %652 = vmatpush2.bf16.msra.mxu0 0
        %653 = vmatprep.mubr.bf16.mxu0 0
        %654 = vmatmul.mubr.bf16.gmra.mxu0 %v619
        %v655 = vpop.f32.mrf.mxu0
        %v656 = vadd.f32 %v616, %v655
        %v657 = vpop.f32.mrf.mxu0
        %v658 = vpop.f32.mrf.mxu0
        %v659 = vpop.f32.mrf.mxu0
        %660 = vdwg.mxu0
        %v661 = vtanh.pop %v656
        %v662 = vmul.f32 %v661, 0.5
        %v663 = vadd.f32 %v662, 0.5
        %665 = vrot.lane.b32.xlu0 %v661, 64
        %v666 = vpop.permute.xlu0 %665
        %v668 = vmul.f32 %v663, %v666
        %v669 = vtanh.pop %v668
        %671 = vrot.lane.b32.xlu0 %v669, 32
        %v672 = vpop.permute.xlu0 %671
        %v674 = vmul.f32 %v663, %v672
        %676 = vrot.lane.b32.xlu0 %v674, 64
        %v677 = vpop.permute.xlu0 %676
        %679 = vst.msk [vmem:[%s241 + $0x5] sm:$0x1] %vm337, %v677
        %v680 = vpack.c.bf16 %v674, %v674
        %682 = vrot.lane.b32.xlu0 %v680, 64
        %v683 = vpop.permute.xlu0 %682
        %v684 = vrot.slane %v318, 6
        %v687 = vsel %vm274, %v683, 0
        %689 = vmatprep.subr.bf16.mxu0 0
        %690 = vmatpush1.bf16.msra.mxu0 0
        %691 = vmatprep.subr.bf16.mxu0 0
        %692 = vmatpush1.bf16.msra.mxu0 0
        %693 = vmatprep.subr.bf16.mxu0 0
        %694 = vmatpush1.bf16.msra.mxu0 0
        %695 = vmatprep.subr.bf16.mxu0 0
        %696 = vmatpush1.bf16.msra.mxu0 0
        %697 = vmatprep.subr.bf16.mxu0 0
        %698 = vmatpush1.bf16.msra.mxu0 0
        %699 = vmatprep.subr.bf16.mxu0 0
        %700 = vmatpush1.bf16.msra.mxu0 0
        %701 = vmatprep.subr.bf16.mxu0 0
        %702 = vmatpush1.bf16.msra.mxu0 %v258
        %703 = vmatprep.subr.bf16.mxu0 0
        %704 = vmatpush1.bf16.msra.mxu0 %v257
        %705 = vmatprep.subr.bf16.mxu0 0
        %706 = vmatpush2.bf16.msra.mxu0 0
        %707 = vmatprep.subr.bf16.mxu0 0
        %708 = vmatpush2.bf16.msra.mxu0 0
        %709 = vmatprep.subr.bf16.mxu0 0
        %710 = vmatpush2.bf16.msra.mxu0 0
        %711 = vmatprep.subr.bf16.mxu0 0
        %712 = vmatpush2.bf16.msra.mxu0 0
        %713 = vmatprep.subr.bf16.mxu0 0
        %714 = vmatpush2.bf16.msra.mxu0 0
        %715 = vmatprep.subr.bf16.mxu0 0
        %716 = vmatpush2.bf16.msra.mxu0 0
        %717 = vmatprep.subr.bf16.mxu0 0
        %718 = vmatpush2.bf16.msra.mxu0 0
        %719 = vmatprep.subr.bf16.mxu0 0
        %720 = vmatpush2.bf16.msra.mxu0 0
        %721 = vmatprep.mubr.bf16.mxu0 0
        %722 = vmatmul.mubr.bf16.gmra.mxu0 %v687
        %v723 = vpop.f32.mrf.mxu0
        %v724 = vadd.f32 %v684, %v723
        %v725 = vpop.f32.mrf.mxu0
        %v726 = vpop.f32.mrf.mxu0
        %v727 = vpop.f32.mrf.mxu0
        %728 = vdwg.mxu0
        %v729 = vtanh.pop %v724
        %v730 = vmul.f32 %v729, 0.5
        %v731 = vadd.f32 %v730, 0.5
        %733 = vrot.lane.b32.xlu0 %v729, 64
        %v734 = vpop.permute.xlu0 %733
        %v736 = vmul.f32 %v731, %v734
        %v737 = vtanh.pop %v736
        %739 = vrot.lane.b32.xlu0 %v737, 32
        %v740 = vpop.permute.xlu0 %739
        %v742 = vmul.f32 %v731, %v740
        %744 = vrot.lane.b32.xlu0 %v742, 64
        %v745 = vpop.permute.xlu0 %744
        %747 = vst.msk [vmem:[%s241 + $0x6] sm:$0x1] %vm337, %v745
        %v748 = vpack.c.bf16 %v742, %v742
        %750 = vrot.lane.b32.xlu0 %v748, 64
        %v751 = vpop.permute.xlu0 %750
        %v752 = vrot.slane %v318, 7
        %v755 = vsel %vm274, %v751, 0
        %757 = vmatprep.subr.bf16.mxu0 0
        %758 = vmatpush1.bf16.msra.mxu0 0
        %759 = vmatprep.subr.bf16.mxu0 0
        %760 = vmatpush1.bf16.msra.mxu0 0
        %761 = vmatprep.subr.bf16.mxu0 0
        %762 = vmatpush1.bf16.msra.mxu0 0
        %763 = vmatprep.subr.bf16.mxu0 0
        %764 = vmatpush1.bf16.msra.mxu0 0
        %765 = vmatprep.subr.bf16.mxu0 0
        %766 = vmatpush1.bf16.msra.mxu0 0
        %767 = vmatprep.subr.bf16.mxu0 0
        %768 = vmatpush1.bf16.msra.mxu0 0
        %769 = vmatprep.subr.bf16.mxu0 0
        %770 = vmatpush1.bf16.msra.mxu0 %v258
        %771 = vmatprep.subr.bf16.mxu0 0
        %772 = vmatpush1.bf16.msra.mxu0 %v257
        %773 = vmatprep.subr.bf16.mxu0 0
        %774 = vmatpush2.bf16.msra.mxu0 0
        %775 = vmatprep.subr.bf16.mxu0 0
        %776 = vmatpush2.bf16.msra.mxu0 0
        %777 = vmatprep.subr.bf16.mxu0 0
        %778 = vmatpush2.bf16.msra.mxu0 0
        %779 = vmatprep.subr.bf16.mxu0 0
        %780 = vmatpush2.bf16.msra.mxu0 0
        %781 = vmatprep.subr.bf16.mxu0 0
        %782 = vmatpush2.bf16.msra.mxu0 0
        %783 = vmatprep.subr.bf16.mxu0 0
        %784 = vmatpush2.bf16.msra.mxu0 0
        %785 = vmatprep.subr.bf16.mxu0 0
        %786 = vmatpush2.bf16.msra.mxu0 0
        %787 = vmatprep.subr.bf16.mxu0 0
        %788 = vmatpush2.bf16.msra.mxu0 0
        %789 = vmatprep.mubr.bf16.mxu0 0
        %790 = vmatmul.mubr.bf16.gmra.mxu0 %v755
        %v791 = vpop.f32.mrf.mxu0
        %v792 = vadd.f32 %v752, %v791
        %v793 = vpop.f32.mrf.mxu0
        %v794 = vpop.f32.mrf.mxu0
        %v795 = vpop.f32.mrf.mxu0
        %796 = vdwg.mxu0
        %v797 = vtanh.pop %v792
        %v798 = vmul.f32 %v797, 0.5
        %v799 = vadd.f32 %v798, 0.5
        %801 = vrot.lane.b32.xlu0 %v797, 64
        %v802 = vpop.permute.xlu0 %801
        %v804 = vmul.f32 %v799, %v802
        %v805 = vtanh.pop %v804
        %807 = vrot.lane.b32.xlu0 %v805, 32
        %v808 = vpop.permute.xlu0 %807
        %v810 = vmul.f32 %v799, %v808
        %812 = vrot.lane.b32.xlu0 %v810, 64
        %v813 = vpop.permute.xlu0 %812
        %815 = vst.msk [vmem:[%s241 + $0x7] sm:$0x1] %vm337, %v813
        %s816 = sand.u32 %s119, 1
        %s817 = scalar_lea.sflag [#allocation4], %s816
        %s818 = sand.u32 %s119, 1
        %s819 = smul.addr %s818, 8
        %s820 = scalar_lea.vmem [#allocation8], %s819
        // Predicated region
        $region49: #{tpu_custom_call.1} parent=35 // pred_check
          %p821 = pneg %p129
        $region50: #{tpu_custom_call.1} parent=35 // pred_check_branch
          %823 = sbr.rel (%p821) target = $region52
        $region51: #{tpu_custom_call.1} parent=35 // pred_region
          %s825 = ssub.s32 128, 128
          %826 = vsyncadd %s817, %s825
          %s827 = smul.addr %s22, 128
          %s828 = scalar_lea.hbm %s4, %s827
          %s830 = sshll.u32 %s820, 4
          %s831 = int_to_ptr.vmem [resolvable:$true] %s830
          %833 = dma.vmem_to_hbm [thread:$0]  %s831, 128, %s828, %s817
        $region52: #{tpu_custom_call.1} parent=35 // pred_fallthru
          _
      $region36: #{tpu_custom_call.1} parent=5 // pred_fallthru
        _
      %p834 = scmp.le.s32.totalorder 2, %s17
      // Predicated region
      $region53: #{tpu_custom_call.1} parent=5 // pred_check
        %p835 = pneg %p834
      $region54: #{tpu_custom_call.1} parent=5 // pred_check_branch
        %837 = sbr.rel (%p835) target = $region56
      $region55: #{tpu_custom_call.1} parent=5 // pred_region
        %s838 = ssub.s32 %s17, 2
        // Predicated region
        $region57: #{tpu_custom_call.1} parent=55 // pred_check
          %p839 = pneg %p135
        $region58: #{tpu_custom_call.1} parent=55 // pred_check_branch
          %841 = sbr.rel (%p839) target = $region60
        $region59: #{tpu_custom_call.1} parent=55 // pred_region
          %s842 = sand.u32 %s120, 1
          %s843 = scalar_lea.sflag [#allocation4], %s842
          %s844 = sand.u32 %s120, 1
          %s845 = smul.addr %s844, 8
          %s846 = scalar_lea.vmem [#allocation8], %s845
          %847 = dma.done %s843, 128
        $region60: #{tpu_custom_call.1} parent=55 // pred_fallthru
          _
      $region56: #{tpu_custom_call.1} parent=5 // pred_fallthru
        _
    $region6: #{tpu_custom_call.1} parent=1 // loop_footer
      %s21 = sadd.s32 1, %s17
    $region7: #{tpu_custom_call.1} parent=1 // loop_footer_branch
      %16 = sbr.rel target = $region3
    $region8: #{tpu_custom_call.1} parent=1 // loop_exit
      _
    %848 = vsyncpa [#allocation3], 1
    %s849 = scalar_lea.sflag [#allocation3], 1
    %850 = vsyncpa %s849, 1
    %851 = vsyncpa [#allocation6], 1
    %852 = vsyncpa [#allocation4], 1
    %s853 = scalar_lea.sflag [#allocation4], 1
    %854 = vsyncpa %s853, 1

</llo_original>
